<compile_context>
chip_gen: v5e
topology: v5e:2x2
jax: 0.10.0
libtpu: 0.0.40
codegen_flags: <defaults>
</compile_context>

<pallas_src>
import functools

import jax
import jax.numpy as jnp
from jax.experimental import pallas as pl
from jax.experimental.pallas import tpu as pltpu

DIM = 32                 # uniform padded layer width (max of 11/16/32/16/1)
DEFAULT_TILE_B = 1024    # batch (lane) tile; multiple of 128


def _make_mlp_kernel(dot_dtype):
    def _mlp_kernel(xt_ref, w_ref, b_ref, o_ref):
        # xt_ref: [DIM, TB] dot_dtype   (features on sublanes, batch on lanes)
        # w_ref : [4, DIM, DIM] dot_dtype  (zero-padded, [out, in] layout)
        # b_ref : [4, DIM, 1]  f32        (zero-padded column biases)
        # o_ref : [1, TB] f32
        h = xt_ref[...]
        for l in range(3):                                   # Linear + ReLU x3
            z = jnp.dot(w_ref[l], h, preferred_element_type=jnp.float32)
            z = jnp.maximum(z + b_ref[l], 0.0)               # f32 bias + ReLU
            h = z.astype(dot_dtype)
        z = jnp.dot(w_ref[3], h, preferred_element_type=jnp.float32) + b_ref[3]
        o_ref[...] = z[0:1, :]                               # real output row
    return _mlp_kernel


def _pack_params(params, dot_dtype):
    """Zero-pad every layer to (DIM, DIM)/(DIM, 1) and stack into two operands."""
    ws, bs = [], []
    for name in ("layer_1", "layer_2", "layer_3", "layer_out"):
        w, b = params[name]            # w: [in, out] f32, b: [1, out] f32
        wt = w.T                       # -> [out, in]
        out_d, in_d = wt.shape
        ws.append(jnp.zeros((DIM, DIM), jnp.float32).at[:out_d, :in_d].set(wt))
        bs.append(jnp.zeros((DIM, 1), jnp.float32).at[:out_d, 0].set(b[0]))
    w_packed = jnp.stack(ws).astype(dot_dtype)   # [4, DIM, DIM]
    b_packed = jnp.stack(bs)                     # [4, DIM, 1] (stays f32)
    return w_packed, b_packed


@functools.partial(jax.jit, static_argnames=("tile_b", "dot_dtype"))
def multiple_regression_forward(x, params, *, tile_b=DEFAULT_TILE_B,
                                dot_dtype=jnp.bfloat16):
    """x: [B, num_features] f32. params: dict name -> (w [in,out], b [1,out])."""
    B, F = x.shape
    assert F <= DIM, "num_features must fit in the padded width"
    w_packed, b_packed = _pack_params(params, dot_dtype)

    # Batch tiling: single lane-dense block for small batches, tiled otherwise.
    if B <= tile_b:
        tb = max(128, pl.cdiv(B, 128) * 128)
    else:
        tb = tile_b
    bp_total = pl.cdiv(B, tb) * tb
    grid = (bp_total // tb,)

    # Transpose + zero-pad input to [DIM, bp_total] (batch on the lane axis).
    xt = jnp.zeros((DIM, bp_total), dot_dtype).at[:F, :B].set(
        x.T.astype(dot_dtype))

    out = pl.pallas_call(
        _make_mlp_kernel(dot_dtype),
        out_shape=jax.ShapeDtypeStruct((1, bp_total), jnp.float32),
        grid=grid,
        in_specs=[
            pl.BlockSpec((DIM, tb), lambda i: (0, i)),          # x tile
            pl.BlockSpec((4, DIM, DIM), lambda i: (0, 0, 0)),   # resident W
            pl.BlockSpec((4, DIM, 1), lambda i: (0, 0, 0)),     # resident b
        ],
        out_specs=pl.BlockSpec((1, tb), lambda i: (0, i)),
        compiler_params=pltpu.CompilerParams(
            dimension_semantics=("parallel",)),
    )(xt, w_packed, b_packed)

    return out[:, :B].reshape(B, 1)


def init_params(key, num_features):
    """Deterministic init mimicking nn.Linear default (U[-1/sqrt(fan_in), +])."""
    dims = [(num_features, 16), (16, 32), (32, 16), (16, 1)]
    names = ["layer_1", "layer_2", "layer_3", "layer_out"]
    params = {}
    for name, (fan_in, fan_out) in zip(names, dims):
        key, kw, kb = jax.random.split(key, 3)
        bound = 1.0 / jnp.sqrt(jnp.float32(fan_in))
        w = jax.random.uniform(kw, (fan_in, fan_out), jnp.float32, -bound, bound)
        b = jax.random.uniform(kb, (1, fan_out), jnp.float32, -bound, bound)
        params[name] = (w, b)
    return params


def _reference(x, params, dot_dtype=jnp.float32):
    """Pure-JAX reference mirroring the kernel's matmul precision choice."""
    h = x.astype(dot_dtype)
    for name in ("layer_1", "layer_2", "layer_3"):
        w, b = params[name]
        z = jnp.dot(h, w.astype(dot_dtype),
                    preferred_element_type=jnp.float32) + b
        h = jnp.maximum(z, 0.0).astype(dot_dtype)
    w, b = params["layer_out"]
    return jnp.dot(h, w.astype(dot_dtype),
                   preferred_element_type=jnp.float32) + b


if __name__ == "__main__":
    key = jax.random.PRNGKey(0)
    num_features = 11   # red-wine dataset has 11 input features
    batch = 8

    key, kx = jax.random.split(key)
    x = jax.random.normal(kx, (batch, num_features), jnp.float32)
    params = init_params(key, num_features)

    # Small-batch (single-block fast path).
    out = jax.block_until_ready(multiple_regression_forward(x, params))
    assert out.shape == (batch, 1)
    ref_bf16 = _reference(x, params, dot_dtype=jnp.bfloat16)
    assert jnp.allclose(out, ref_bf16, atol=1e-3, rtol=1e-3), "mismatch vs bf16 ref"
    ref_f32 = _reference(x, params, dot_dtype=jnp.float32)
    assert jnp.allclose(out, ref_f32, atol=5e-2, rtol=5e-2), "bf16 drift too large"

    # Larger batch exercises the multi-tile parallel grid path.
    key, kx2 = jax.random.split(key)
    x_big = jax.random.normal(kx2, (3000, num_features), jnp.float32)
    out_big = jax.block_until_ready(multiple_regression_forward(x_big, params))
    assert out_big.shape == (3000, 1)
    ref_big = _reference(x_big, params, dot_dtype=jnp.bfloat16)
    assert jnp.allclose(out_big, ref_big, atol=1e-3, rtol=1e-3), "mismatch (tiled)"

    print("KERNEL_OK")
</pallas_src>

<mosaic_0001>
module attributes {stable_mosaic.version = 11 : i64} {
  func.func @_mlp_kernel(%arg0: i32, %arg1: memref<32x128xbf16, #tpu.memory_space<vmem>>, %arg2: memref<4x32x32xbf16, #tpu.memory_space<vmem>>, %arg3: memref<4x32x1xf32, #tpu.memory_space<vmem>>, %arg4: memref<1x128xf32, #tpu.memory_space<vmem>>) attributes {dimension_semantics = [#tpu.dimension_semantics<parallel>], iteration_bounds = array<i64: 1>, scalar_prefetch = 0 : i64, scratch_operands = 0 : i64, tpu.core_type = #tpu.core_type<tc>, window_params = [{transform_indices = @transform_0, window_bounds = array<i64: 32, 128>}, {pipeline_mode = #tpu.pipeline_mode<synchronous>, transform_indices = @transform_1, window_bounds = array<i64: 4, 32, 32>}, {pipeline_mode = #tpu.pipeline_mode<synchronous>, transform_indices = @transform_2, window_bounds = array<i64: 4, 32, 1>}, {transform_indices = @transform_3, window_bounds = array<i64: 1, 128>}]} {
    %c0 = arith.constant 0 : index
    %c0_0 = arith.constant 0 : index
    %0 = vector.load %arg1[%c0, %c0_0] : memref<32x128xbf16, #tpu.memory_space<vmem>>, vector<32x128xbf16>
    %c0_1 = arith.constant 0 : index
    %c0_2 = arith.constant 0 : index
    %c0_3 = arith.constant 0 : index
    %1 = vector.load %arg2[%c0_1, %c0_2, %c0_3] : memref<4x32x32xbf16, #tpu.memory_space<vmem>>, vector<1x32x32xbf16>
    %2 = vector.shape_cast %1 : vector<1x32x32xbf16> to vector<32x32xbf16>
    %cst = arith.constant dense<0.000000e+00> : vector<32x128xf32>
    %3 = tpu.matmul %2, %0, %cst {dimension_numbers = #tpu.dot_dimension_numbers<[1], [0], [0], [1], [0, 0, 1, 1], [], []>} : vector<32x32xbf16>, vector<32x128xbf16>, vector<32x128xf32> -> vector<32x128xf32>
    %c0_4 = arith.constant 0 : index
    %c0_5 = arith.constant 0 : index
    %c0_6 = arith.constant 0 : index
    %4 = vector.load %arg3[%c0_4, %c0_5, %c0_6] : memref<4x32x1xf32, #tpu.memory_space<vmem>>, vector<1x32x1xf32>
    %5 = vector.shape_cast %4 : vector<1x32x1xf32> to vector<32x1xf32>
    %6 = vector.broadcast %5 : vector<32x1xf32> to vector<32x128xf32>
    %7 = arith.addf %3, %6 : vector<32x128xf32>
    %cst_7 = arith.constant 0.000000e+00 : f32
    %8 = vector.broadcast %cst_7 : f32 to vector<32x128xf32>
    %9 = arith.maximumf %7, %8 : vector<32x128xf32>
    %10 = arith.truncf %9 : vector<32x128xf32> to vector<32x128xbf16>
    %c1 = arith.constant 1 : index
    %c0_8 = arith.constant 0 : index
    %c0_9 = arith.constant 0 : index
    %11 = vector.load %arg2[%c1, %c0_8, %c0_9] : memref<4x32x32xbf16, #tpu.memory_space<vmem>>, vector<1x32x32xbf16>
    %12 = vector.shape_cast %11 : vector<1x32x32xbf16> to vector<32x32xbf16>
    %cst_10 = arith.constant dense<0.000000e+00> : vector<32x128xf32>
    %13 = tpu.matmul %12, %10, %cst_10 {dimension_numbers = #tpu.dot_dimension_numbers<[1], [0], [0], [1], [0, 0, 1, 1], [], []>} : vector<32x32xbf16>, vector<32x128xbf16>, vector<32x128xf32> -> vector<32x128xf32>
    %c1_11 = arith.constant 1 : index
    %c0_12 = arith.constant 0 : index
    %c0_13 = arith.constant 0 : index
    %14 = vector.load %arg3[%c1_11, %c0_12, %c0_13] : memref<4x32x1xf32, #tpu.memory_space<vmem>>, vector<1x32x1xf32>
    %15 = vector.shape_cast %14 : vector<1x32x1xf32> to vector<32x1xf32>
    %16 = vector.broadcast %15 : vector<32x1xf32> to vector<32x128xf32>
    %17 = arith.addf %13, %16 : vector<32x128xf32>
    %cst_14 = arith.constant 0.000000e+00 : f32
    %18 = vector.broadcast %cst_14 : f32 to vector<32x128xf32>
    %19 = arith.maximumf %17, %18 : vector<32x128xf32>
    %20 = arith.truncf %19 : vector<32x128xf32> to vector<32x128xbf16>
    %c2 = arith.constant 2 : index
    %c0_15 = arith.constant 0 : index
    %c0_16 = arith.constant 0 : index
    %21 = vector.load %arg2[%c2, %c0_15, %c0_16] : memref<4x32x32xbf16, #tpu.memory_space<vmem>>, vector<1x32x32xbf16>
    %22 = vector.shape_cast %21 : vector<1x32x32xbf16> to vector<32x32xbf16>
    %cst_17 = arith.constant dense<0.000000e+00> : vector<32x128xf32>
    %23 = tpu.matmul %22, %20, %cst_17 {dimension_numbers = #tpu.dot_dimension_numbers<[1], [0], [0], [1], [0, 0, 1, 1], [], []>} : vector<32x32xbf16>, vector<32x128xbf16>, vector<32x128xf32> -> vector<32x128xf32>
    %c2_18 = arith.constant 2 : index
    %c0_19 = arith.constant 0 : index
    %c0_20 = arith.constant 0 : index
    %24 = vector.load %arg3[%c2_18, %c0_19, %c0_20] : memref<4x32x1xf32, #tpu.memory_space<vmem>>, vector<1x32x1xf32>
    %25 = vector.shape_cast %24 : vector<1x32x1xf32> to vector<32x1xf32>
    %26 = vector.broadcast %25 : vector<32x1xf32> to vector<32x128xf32>
    %27 = arith.addf %23, %26 : vector<32x128xf32>
    %cst_21 = arith.constant 0.000000e+00 : f32
    %28 = vector.broadcast %cst_21 : f32 to vector<32x128xf32>
    %29 = arith.maximumf %27, %28 : vector<32x128xf32>
    %30 = arith.truncf %29 : vector<32x128xf32> to vector<32x128xbf16>
    %c3 = arith.constant 3 : index
    %c0_22 = arith.constant 0 : index
    %c0_23 = arith.constant 0 : index
    %31 = vector.load %arg2[%c3, %c0_22, %c0_23] : memref<4x32x32xbf16, #tpu.memory_space<vmem>>, vector<1x32x32xbf16>
    %32 = vector.shape_cast %31 : vector<1x32x32xbf16> to vector<32x32xbf16>
    %cst_24 = arith.constant dense<0.000000e+00> : vector<32x128xf32>
    %33 = tpu.matmul %32, %30, %cst_24 {dimension_numbers = #tpu.dot_dimension_numbers<[1], [0], [0], [1], [0, 0, 1, 1], [], []>} : vector<32x32xbf16>, vector<32x128xbf16>, vector<32x128xf32> -> vector<32x128xf32>
    %c3_25 = arith.constant 3 : index
    %c0_26 = arith.constant 0 : index
    %c0_27 = arith.constant 0 : index
    %34 = vector.load %arg3[%c3_25, %c0_26, %c0_27] : memref<4x32x1xf32, #tpu.memory_space<vmem>>, vector<1x32x1xf32>
    %35 = vector.shape_cast %34 : vector<1x32x1xf32> to vector<32x1xf32>
    %36 = vector.broadcast %35 : vector<32x1xf32> to vector<32x128xf32>
    %37 = arith.addf %33, %36 : vector<32x128xf32>
    %38 = vector.extract_strided_slice %37 {offsets = [0, 0], sizes = [1, 128], strides = [1, 1]} : vector<32x128xf32> to vector<1x128xf32>
    %c0_28 = arith.constant 0 : index
    %c0_29 = arith.constant 0 : index
    %39 = vector.load %arg4[%c0_28, %c0_29] : memref<1x128xf32, #tpu.memory_space<vmem>>, vector<1x128xf32>
    tpu.vector_store %arg4[%c0_28, %c0_29], %38 {strides = array<i32>} : memref<1x128xf32, #tpu.memory_space<vmem>>, vector<1x128xf32>,
    return
  }
  func.func @transform_0(%arg0: i32) -> (i32, i32) {
    %c0_i32 = arith.constant 0 : i32
    %c0_i32_0 = arith.constant 0 : i32
    return %c0_i32, %arg0 : i32, i32
  }
  func.func @transform_1(%arg0: i32) -> (i32, i32, i32) {
    %c0_i32 = arith.constant 0 : i32
    %c0_i32_0 = arith.constant 0 : i32
    %c0_i32_1 = arith.constant 0 : i32
    %c0_i32_2 = arith.constant 0 : i32
    return %c0_i32, %c0_i32_0, %c0_i32_1 : i32, i32, i32
  }
  func.func @transform_2(%arg0: i32) -> (i32, i32, i32) {
    %c0_i32 = arith.constant 0 : i32
    %c0_i32_0 = arith.constant 0 : i32
    %c0_i32_1 = arith.constant 0 : i32
    %c0_i32_2 = arith.constant 0 : i32
    return %c0_i32, %c0_i32_0, %c0_i32_1 : i32, i32, i32
  }
  func.func @transform_3(%arg0: i32) -> (i32, i32) {
    %c0_i32 = arith.constant 0 : i32
    %c0_i32_0 = arith.constant 0 : i32
    return %c0_i32, %arg0 : i32, i32
  }
}

</mosaic_0001>

<llo_original>
// kernel: multiple_regression_forward.1
$region0: #{multiple_regression_forward.1}
  #allocation0 [shape = 'u32[]', space=smem, size = 0x4, offset = 0x4, fixed_abs, tag = 'smem constant byte address 0x4 - core index']
  #allocation1 [shape = 'u32[72,128]{1,0:T(1,128)}', space=vmem, size = 0x9000, scoped, tag = 'internal scratch']
  %s0 = inlined_call_operand.vmem [shape: bf16[32,128], index: 0, kind: input, shape index: {}]
  %s1 = inlined_call_operand.vmem [shape: bf16[4,32,32], index: 1, kind: input, shape index: {}]
  %s2 = inlined_call_operand.vmem [shape: f32[4,32,1], index: 2, kind: input, shape index: {}]
  %s3 = inlined_call_operand.vmem [shape: f32[1,128], index: 3, kind: output, shape index: {}]
  %s4 = sld [smem:[#allocation0]]
  $region22: #{multiple_regression_forward.1} parent=0
    _
  %s6 = ssub.s32 1, %s4
  %s7 = scalar_select 0, %s6, %s4
  // Predicated region
  $region2: #{multiple_regression_forward.1} parent=0 // pred_check
    _
  $region3: #{multiple_regression_forward.1} parent=0 // pred_check_branch
    %9 = sbr.rel (0) target = $region5
  $region4: #{multiple_regression_forward.1} parent=0 // pred_region
    _
  $region5: #{multiple_regression_forward.1} parent=0 // pred_fallthru
    _
  // Predicated region
  $region6: #{multiple_regression_forward.1} parent=0 // pred_check
    _
  $region7: #{multiple_regression_forward.1} parent=0 // pred_check_branch
    %11 = sbr.rel (0) target = $region9
  $region8: #{multiple_regression_forward.1} parent=0 // pred_region
    _
  $region9: #{multiple_regression_forward.1} parent=0 // pred_fallthru
    _
  // Predicated region
  $region10: #{multiple_regression_forward.1} parent=0 // pred_check
    _
  $region11: #{multiple_regression_forward.1} parent=0 // pred_check_branch
    %13 = sbr.rel (0) target = $region13
  $region12: #{multiple_regression_forward.1} parent=0 // pred_region
    _
  $region13: #{multiple_regression_forward.1} parent=0 // pred_fallthru
    _
  %v15 = vld [vmem:[%s0] sm:$0xf]
  %v16 = vld [vmem:[%s0 + $0x4] sm:$0xf]
  %v17 = vld [vmem:[%s0 + $0x8] sm:$0xf]
  %v18 = vld [vmem:[%s0 + $0xc] sm:$0xf]
  %v19 = vld [vmem:[%s1] sm:$0xf]
  %v20 = vld [vmem:[%s1 + $0x4] sm:$0xf]
  %v21 = vld [vmem:[%s1 + $0x8] sm:$0xf]
  %v22 = vld [vmem:[%s1 + $0xc] sm:$0xf]
  %v23 = vld [vmem:[%s2] sm:$0xff]
  %v24 = vld [vmem:[%s2 + $0x8] sm:$0xff]
  %v25 = vld [vmem:[%s2 + $0x10] sm:$0xff]
  %v26 = vld [vmem:[%s2 + $0x18] sm:$0xff]
  %28 = vset.pattern.permute.xlu0 0
  %29 = vperm.xlu0 %28, %v23
  %v30 = vpop.permute.xlu0 %29
  %33 = vset.pattern.permute.xlu0 0
  %34 = vperm.xlu0 %33, %v24
  %v35 = vpop.permute.xlu0 %34
  %38 = vset.pattern.permute.xlu0 0
  %39 = vperm.xlu0 %38, %v25
  %v40 = vpop.permute.xlu0 %39
  %43 = vset.pattern.permute.xlu0 0
  %44 = vperm.xlu0 %43, %v26
  %v45 = vpop.permute.xlu0 %44
  %v51 = vunpack.c.l.b16 %v19
  %v52 = vunpack.c.l.b16 %v20
  %v53 = vunpack.c.l.b16 %v21
  %v54 = vunpack.c.l.b16 %v22
  %v55 = vpack.c.b16 %v52, %v51
  %v56 = vpack.c.b16 %v54, %v53
  %v61 = vunpack.c.l.b16 %v15
  %v62 = vunpack.c.l.b16 %v16
  %v63 = vunpack.c.l.b16 %v17
  %v64 = vunpack.c.l.b16 %v18
  %v65 = vpack.c.b16 %v62, %v61
  %v66 = vpack.c.b16 %v64, %v63
  %vm69 = vcmask 261120
  %v71 = vsel %vm69, %v55, 0
  %v74 = vsel %vm69, %v56, 0
  %76 = vmatpush.bf16.msra.mxu0 0
  %77 = vmatpush.bf16.msra.mxu0 0
  %78 = vmatpush.bf16.msra.mxu0 0
  %79 = vmatpush.bf16.msra.mxu0 0
  %80 = vmatpush.bf16.msra.mxu0 0
  %81 = vmatpush.bf16.msra.mxu0 0
  %82 = vmatpush.bf16.msra.mxu0 %v66
  %83 = vmatpush.bf16.msra.mxu0 %v65
  %84 = vmatmul.bf16.gmra.mxu0 %v71
  %v85 = vpop.f32.mrf.mxu0
  %v86 = vadd.f32 %v30, %v85
  %v87 = vpop.f32.mrf.mxu0
  %v88 = vadd.f32 %v35, %v87
  %89 = vmatmul.bf16.gmra.mxu0 %v74
  %v90 = vpop.f32.mrf.mxu0
  %v91 = vadd.f32 %v40, %v90
  %v92 = vpop.f32.mrf.mxu0
  %v93 = vadd.f32 %v45, %v92
  %94 = vdwg.mxu0
  %v95 = vmax.f32 %v86, 0.0
  %v96 = vmax.f32 %v88, 0.0
  %v97 = vmax.f32 %v91, 0.0
  %v98 = vmax.f32 %v93, 0.0
  %v99 = vpack.c.bf16 %v96, %v95
  %v100 = vpack.c.bf16 %v98, %v97
  %s101 = scalar_lea.vmem %s1, 16
  %v102 = vld [vmem:[%s101] sm:$0xf]
  %v103 = vld [vmem:[%s101 + $0x4] sm:$0xf]
  %v104 = vld [vmem:[%s101 + $0x8] sm:$0xf]
  %v105 = vld [vmem:[%s101 + $0xc] sm:$0xf]
  %s106 = scalar_lea.vmem %s2, 32
  %v107 = vld [vmem:[%s106] sm:$0xff]
  %v108 = vld [vmem:[%s106 + $0x8] sm:$0xff]
  %v109 = vld [vmem:[%s106 + $0x10] sm:$0xff]
  %v110 = vld [vmem:[%s106 + $0x18] sm:$0xff]
  %112 = vset.pattern.permute.xlu0 0
  %113 = vperm.xlu0 %112, %v107
  %v114 = vpop.permute.xlu0 %113
  %117 = vset.pattern.permute.xlu0 0
  %118 = vperm.xlu0 %117, %v108
  %v119 = vpop.permute.xlu0 %118
  %122 = vset.pattern.permute.xlu0 0
  %123 = vperm.xlu0 %122, %v109
  %v124 = vpop.permute.xlu0 %123
  %127 = vset.pattern.permute.xlu0 0
  %128 = vperm.xlu0 %127, %v110
  %v129 = vpop.permute.xlu0 %128
  %v135 = vunpack.c.l.b16 %v102
  %v136 = vunpack.c.l.b16 %v103
  %v137 = vunpack.c.l.b16 %v104
  %v138 = vunpack.c.l.b16 %v105
  %v139 = vpack.c.b16 %v136, %v135
  %v140 = vpack.c.b16 %v138, %v137
  %v142 = vsel %vm69, %v139, 0
  %v145 = vsel %vm69, %v140, 0
  %147 = vmatpush.bf16.msra.mxu0 0
  %148 = vmatpush.bf16.msra.mxu0 0
  %149 = vmatpush.bf16.msra.mxu0 0
  %150 = vmatpush.bf16.msra.mxu0 0
  %151 = vmatpush.bf16.msra.mxu0 0
  %152 = vmatpush.bf16.msra.mxu0 0
  %153 = vmatpush.bf16.msra.mxu0 %v100
  %154 = vmatpush.bf16.msra.mxu0 %v99
  %155 = vmatmul.bf16.gmra.mxu0 %v142
  %v156 = vpop.f32.mrf.mxu0
  %v157 = vadd.f32 %v114, %v156
  %v158 = vpop.f32.mrf.mxu0
  %v159 = vadd.f32 %v119, %v158
  %160 = vmatmul.bf16.gmra.mxu0 %v145
  %v161 = vpop.f32.mrf.mxu0
  %v162 = vadd.f32 %v124, %v161
  %v163 = vpop.f32.mrf.mxu0
  %v164 = vadd.f32 %v129, %v163
  %165 = vdwg.mxu0
  %v166 = vmax.f32 %v157, 0.0
  %v167 = vmax.f32 %v159, 0.0
  %v168 = vmax.f32 %v162, 0.0
  %v169 = vmax.f32 %v164, 0.0
  %v170 = vpack.c.bf16 %v167, %v166
  %v171 = vpack.c.bf16 %v169, %v168
  %s172 = scalar_lea.vmem %s1, 32
  %v173 = vld [vmem:[%s172] sm:$0xf]
  %v174 = vld [vmem:[%s172 + $0x4] sm:$0xf]
  %v175 = vld [vmem:[%s172 + $0x8] sm:$0xf]
  %v176 = vld [vmem:[%s172 + $0xc] sm:$0xf]
  %s177 = scalar_lea.vmem %s2, 64
  %v178 = vld [vmem:[%s177] sm:$0xff]
  %v179 = vld [vmem:[%s177 + $0x8] sm:$0xff]
  %v180 = vld [vmem:[%s177 + $0x10] sm:$0xff]
  %v181 = vld [vmem:[%s177 + $0x18] sm:$0xff]
  %183 = vset.pattern.permute.xlu0 0
  %184 = vperm.xlu0 %183, %v178
  %v185 = vpop.permute.xlu0 %184
  %188 = vset.pattern.permute.xlu0 0
  %189 = vperm.xlu0 %188, %v179
  %v190 = vpop.permute.xlu0 %189
  %193 = vset.pattern.permute.xlu0 0
  %194 = vperm.xlu0 %193, %v180
  %v195 = vpop.permute.xlu0 %194
  %198 = vset.pattern.permute.xlu0 0
  %199 = vperm.xlu0 %198, %v181
  %v200 = vpop.permute.xlu0 %199
  %v206 = vunpack.c.l.b16 %v173
  %v207 = vunpack.c.l.b16 %v174
  %v208 = vunpack.c.l.b16 %v175
  %v209 = vunpack.c.l.b16 %v176
  %v210 = vpack.c.b16 %v207, %v206
  %v211 = vpack.c.b16 %v209, %v208
  %v213 = vsel %vm69, %v210, 0
  %v216 = vsel %vm69, %v211, 0
  %218 = vmatpush.bf16.msra.mxu0 0
  %219 = vmatpush.bf16.msra.mxu0 0
  %220 = vmatpush.bf16.msra.mxu0 0
  %221 = vmatpush.bf16.msra.mxu0 0
  %222 = vmatpush.bf16.msra.mxu0 0
  %223 = vmatpush.bf16.msra.mxu0 0
  %224 = vmatpush.bf16.msra.mxu0 %v171
  %225 = vmatpush.bf16.msra.mxu0 %v170
  %226 = vmatmul.bf16.gmra.mxu0 %v213
  %v227 = vpop.f32.mrf.mxu0
  %v228 = vadd.f32 %v185, %v227
  %v229 = vpop.f32.mrf.mxu0
  %v230 = vadd.f32 %v190, %v229
  %231 = vmatmul.bf16.gmra.mxu0 %v216
  %v232 = vpop.f32.mrf.mxu0
  %v233 = vadd.f32 %v195, %v232
  %v234 = vpop.f32.mrf.mxu0
  %v235 = vadd.f32 %v200, %v234
  %236 = vdwg.mxu0
  %v237 = vmax.f32 %v228, 0.0
  %v238 = vmax.f32 %v230, 0.0
  %v239 = vmax.f32 %v233, 0.0
  %v240 = vmax.f32 %v235, 0.0
  %v241 = vpack.c.bf16 %v238, %v237
  %v242 = vpack.c.bf16 %v240, %v239
  %s243 = scalar_lea.vmem %s1, 48
  %v244 = vld [vmem:[%s243] sm:$0xf]
  %v245 = vld [vmem:[%s243 + $0x4] sm:$0xf]
  %v246 = vld [vmem:[%s243 + $0x8] sm:$0xf]
  %v247 = vld [vmem:[%s243 + $0xc] sm:$0xf]
  %s248 = scalar_lea.vmem %s2, 96
  %v249 = vld [vmem:[%s248] sm:$0xff]
  %v250 = vld [vmem:[%s248 + $0x8] sm:$0xff]
  %v251 = vld [vmem:[%s248 + $0x10] sm:$0xff]
  %v252 = vld [vmem:[%s248 + $0x18] sm:$0xff]
  %254 = vset.pattern.permute.xlu0 0
  %255 = vperm.xlu0 %254, %v249
  %v256 = vpop.permute.xlu0 %255
  %259 = vset.pattern.permute.xlu0 0
  %260 = vperm.xlu0 %259, %v250
  %v261 = vpop.permute.xlu0 %260
  %263 = vset.pattern.permute.xlu0 0
  %264 = vperm.xlu0 %263, %v251
  %v265 = vpop.permute.xlu0 %264
  %267 = vset.pattern.permute.xlu0 0
  %268 = vperm.xlu0 %267, %v252
  %v269 = vpop.permute.xlu0 %268
  %v274 = vunpack.c.l.b16 %v244
  %v275 = vunpack.c.l.b16 %v245
  %v276 = vunpack.c.l.b16 %v246
  %v277 = vunpack.c.l.b16 %v247
  %v278 = vpack.c.b16 %v275, %v274
  %v279 = vpack.c.b16 %v277, %v276
  %v281 = vsel %vm69, %v278, 0
  %v284 = vsel %vm69, %v279, 0
  %286 = vmatpush.bf16.msra.mxu0 0
  %287 = vmatpush.bf16.msra.mxu0 0
  %288 = vmatpush.bf16.msra.mxu0 0
  %289 = vmatpush.bf16.msra.mxu0 0
  %290 = vmatpush.bf16.msra.mxu0 0
  %291 = vmatpush.bf16.msra.mxu0 0
  %292 = vmatpush.bf16.msra.mxu0 %v242
  %293 = vmatpush.bf16.msra.mxu0 %v241
  %294 = vmatmul.bf16.gmra.mxu0 %v281
  %v295 = vpop.f32.mrf.mxu0
  %v296 = vadd.f32 %v256, %v295
  %v297 = vpop.f32.mrf.mxu0
  %298 = vmatmul.bf16.gmra.mxu0 %v284
  %v299 = vpop.f32.mrf.mxu0
  %v300 = vpop.f32.mrf.mxu0
  %301 = vdwg.mxu0
  %302 = vst [vmem:[%s3] sm:$0x1] %v296
  // Predicated region
  $region14: #{multiple_regression_forward.1} parent=0 // pred_check
    _
  $region15: #{multiple_regression_forward.1} parent=0 // pred_check_branch
    %304 = sbr.rel (0) target = $region17
  $region16: #{multiple_regression_forward.1} parent=0 // pred_region
    _
  $region17: #{multiple_regression_forward.1} parent=0 // pred_fallthru
    _
  // Predicated region
  $region18: #{multiple_regression_forward.1} parent=0 // pred_check
    _
  $region19: #{multiple_regression_forward.1} parent=0 // pred_check_branch
    %306 = sbr.rel (0) target = $region21
  $region20: #{multiple_regression_forward.1} parent=0 // pred_region
    _
  $region21: #{multiple_regression_forward.1} parent=0 // pred_fallthru
    _

</llo_original>
